<compile_context>
chip_gen: v5e
topology: v5e:2x2
jax: 0.10.0
libtpu: 0.0.40
codegen_flags: <defaults>
</compile_context>

<pallas_src>
import jax
import jax.numpy as jnp
from jax.experimental import pallas as pl
from jax.experimental.pallas import tpu as pltpu


def _make_kernel(n_rows: int, tile_rows: int):
    needs_mask = (n_rows % tile_rows) != 0

    def kernel(act_ref, loc_ref, act_tgt_ref, loc_tgt_ref, out_ref):
        act = act_ref[...].astype(jnp.float32)           # [TN, C]
        loc = loc_ref[...].astype(jnp.float32)           # [TN, C]
        act_t = act_tgt_ref[...]                         # [TN, 1] int32
        loc_t = loc_tgt_ref[...]                         # [TN, 1] int32
        tn, c = act.shape

        col = jax.lax.broadcasted_iota(jnp.int32, (tn, c), 1)

        if needs_mask:
            # Mask rows that fall past the true row count (tail tile only).
            row = jax.lax.broadcasted_iota(jnp.int32, (tn, 1), 0)
            valid = (pl.program_id(0) * tile_rows + row) < n_rows  # [TN,1]
        else:
            valid = None

        def masked(x):
            return x if valid is None else jnp.where(valid, x, 0.0)

        def ce_and_correct(logits, tgt):
            is_tgt = col == tgt                                        # [TN,C]
            # Numerically-stable logsumexp per row.
            m = jnp.max(logits, axis=1, keepdims=True)                 # [TN,1]
            lse = jnp.log(jnp.sum(jnp.exp(logits - m), axis=1,
                                  keepdims=True)) + m                  # [TN,1]
            # Sum of target-class logits over valid rows: one 2-D reduce,
            # no per-row gather intermediate to spill.
            sel = is_tgt if valid is None else (is_tgt & valid)
            tgt_sum = jnp.sum(jnp.where(sel, logits, 0.0))             # scalar
            ce = jnp.sum(masked(lse)) - tgt_sum                        # scalar
            # First-occurrence argmax (matches torch .max(1)[1] tie rule).
            argmax = jnp.min(jnp.where(logits == m, col, c),
                             axis=1, keepdims=True)                    # [TN,1]
            return ce, argmax == tgt                                   # , bool

        act_ce, act_ok = ce_and_correct(act, act_t)
        loc_ce, loc_ok = ce_and_correct(loc, loc_t)

        # BCE(sum) of {0,1} predictions vs {0,1} targets == 100 * #mismatches
        # (torch clamps log at -100), so no log/maximum is needed in-kernel.
        mism = act_ok != loc_ok
        if valid is not None:
            mism = mism & valid
        n_mismatch = jnp.sum(jnp.where(mism, 1.0, 0.0))                # scalar

        # Lane-dense partial record: sublane 0, lanes {0,1,2} carry the three
        # partial sums; everything else zero.  Full (8,128) tile => plain
        # unmasked vector store.
        sub = jax.lax.broadcasted_iota(jnp.int32, (8, 128), 0)
        lane = jax.lax.broadcasted_iota(jnp.int32, (8, 128), 1)
        rec = jnp.where((sub == 0) & (lane == 0), act_ce,
              jnp.where((sub == 0) & (lane == 1), loc_ce,
              jnp.where((sub == 0) & (lane == 2), n_mismatch, 0.0)))
        out_ref[...] = rec[None]

    return kernel


def _pick_row_tile(n_rows: int, n_cols: int, itemsize: int) -> int:
    # VMEM stores the last dim padded to a multiple of 128 lanes, so budget
    # the tile on the *padded* footprint.  2 logit streams x 2 pipeline
    # buffers at <= ~2 MiB each keeps the double-buffered working set well
    # under every generation's scoped-VMEM budget (v7x: 64 MiB physical).
    padded_cols = pl.cdiv(n_cols, 128) * 128
    per_tile_budget = 2 * 1024 * 1024
    tn = per_tile_budget // max(1, padded_cols * itemsize)
    tn = min(tn, 2048)                        # bound (TN,1) reduce intermediates
    tn = min(tn, pl.cdiv(n_rows, 8) * 8)      # no point exceeding (padded) N
    tn = max(8, (tn // 8) * 8)                # sublane aligned
    return int(tn)


def joint_classify_cross_loss(act_predict, act_target, loc_predict, loc_target,
                              weight, row_tile=None):
    """act/loc_predict: [N, C] float logits; act/loc_target: [N] int class ids."""
    n, c = act_predict.shape
    if row_tile is None:
        row_tile = _pick_row_tile(n, c, jnp.dtype(act_predict.dtype).itemsize)
    g = pl.cdiv(n, row_tile)

    act_t = act_target.reshape(n, 1).astype(jnp.int32)
    loc_t = loc_target.reshape(n, 1).astype(jnp.int32)

    # TODO(synk): for C << 128, a lane-dense repacking (folding rows into
    # lanes) would avoid wasting 128 - C lanes per vreg.
    partials = pl.pallas_call(
        _make_kernel(n, row_tile),
        out_shape=jax.ShapeDtypeStruct((g, 8, 128), jnp.float32),
        grid=(g,),
        in_specs=[
            pl.BlockSpec((row_tile, c), lambda i: (i, 0)),
            pl.BlockSpec((row_tile, c), lambda i: (i, 0)),
            pl.BlockSpec((row_tile, 1), lambda i: (i, 0)),
            pl.BlockSpec((row_tile, 1), lambda i: (i, 0)),
        ],
        out_specs=pl.BlockSpec((1, 8, 128), lambda i: (i, 0, 0)),
        compiler_params=pltpu.CompilerParams(
            dimension_semantics=("parallel",),
            vmem_limit_bytes=32 * 1024 * 1024,
        ),
    )(act_predict, loc_predict, act_t, loc_t)

    totals = jnp.sum(partials[:, 0, :], axis=0)      # [128]
    act_loss, loc_loss, mismatches = totals[0], totals[1], totals[2]
    bce = 100.0 * mismatches                         # BCE(sum) on {0,1} values
    return jnp.sqrt(act_loss * act_loss + loc_loss * loc_loss
                    + jnp.float32(weight) * bce)


def _reference(act_predict, act_target, loc_predict, loc_target, weight):
    """Pure-JAX reference mirroring the PyTorch module (reduction='sum')."""
    def ce_sum(logits, tgt):
        logits = logits.astype(jnp.float32)
        lse = jax.nn.logsumexp(logits, axis=1)
        tgt_logit = jnp.take_along_axis(logits, tgt[:, None], axis=1)[:, 0]
        return jnp.sum(lse - tgt_logit)

    act_loss = ce_sum(act_predict, act_target)
    loc_loss = ce_sum(loc_predict, loc_target)
    act_res = (jnp.argmax(act_predict, axis=1) == act_target).astype(jnp.float32)
    loc_res = (jnp.argmax(loc_predict, axis=1) == loc_target).astype(jnp.float32)
    log_p = jnp.maximum(jnp.log(act_res), -100.0)
    log_1mp = jnp.maximum(jnp.log(1.0 - act_res), -100.0)
    bce = jnp.sum(-(loc_res * log_p + (1.0 - loc_res) * log_1mp))
    return jnp.sqrt(act_loss ** 2 + loc_loss ** 2 + weight * bce)


if __name__ == "__main__":
    key = jax.random.PRNGKey(0)
    k1, k2, k3, k4 = jax.random.split(key, 4)

    N, C = 24, 16         # 24 samples, 16 classes (exercises a 2-block grid
    WEIGHT = 0.5          #  with a masked tail when row_tile=16)

    act_predict = jax.random.normal(k1, (N, C), dtype=jnp.float32)
    loc_predict = jax.random.normal(k2, (N, C), dtype=jnp.float32)
    act_target = jax.random.randint(k3, (N,), 0, C, dtype=jnp.int32)
    loc_target = jax.random.randint(k4, (N,), 0, C, dtype=jnp.int32)

    ref = _reference(act_predict, act_target, loc_predict, loc_target, WEIGHT)

    # Multi-block grid with a masked tail tile (24 rows, tile of 16).
    loss = joint_classify_cross_loss(act_predict, act_target,
                                     loc_predict, loc_target, WEIGHT,
                                     row_tile=16)
    loss = jax.block_until_ready(loss)
    assert jnp.allclose(loss, ref, rtol=1e-5, atol=1e-5), (loss, ref)

    # Auto-picked tile (single block, mask elided at trace time).
    loss2 = joint_classify_cross_loss(act_predict, act_target,
                                      loc_predict, loc_target, WEIGHT)
    loss2 = jax.block_until_ready(loss2)
    assert jnp.allclose(loss2, ref, rtol=1e-5, atol=1e-5), (loss2, ref)

    print("KERNEL_OK")
</pallas_src>

<mosaic_0001>
module attributes {stable_mosaic.version = 11 : i64} {
  func.func @kernel(%arg0: i32, %arg1: memref<16x16xf32, #tpu.memory_space<vmem>>, %arg2: memref<16x16xf32, #tpu.memory_space<vmem>>, %arg3: memref<16x1xi32, #tpu.memory_space<vmem>>, %arg4: memref<16x1xi32, #tpu.memory_space<vmem>>, %arg5: memref<1x8x128xf32, #tpu.memory_space<vmem>>) attributes {dimension_semantics = [#tpu.dimension_semantics<parallel>], iteration_bounds = array<i64: 2>, scalar_prefetch = 0 : i64, scratch_operands = 0 : i64, tpu.core_type = #tpu.core_type<tc>, window_params = [{transform_indices = @transform_0, window_bounds = array<i64: 16, 16>}, {transform_indices = @transform_1, window_bounds = array<i64: 16, 16>}, {transform_indices = @transform_2, window_bounds = array<i64: 16, 1>}, {transform_indices = @transform_3, window_bounds = array<i64: 16, 1>}, {transform_indices = @transform_4, window_bounds = array<i64: 1, 8, 128>}]} {
    %c0 = arith.constant 0 : index
    %c0_0 = arith.constant 0 : index
    %0 = vector.load %arg1[%c0, %c0_0] : memref<16x16xf32, #tpu.memory_space<vmem>>, vector<16x16xf32>
    %c0_1 = arith.constant 0 : index
    %c0_2 = arith.constant 0 : index
    %1 = vector.load %arg2[%c0_1, %c0_2] : memref<16x16xf32, #tpu.memory_space<vmem>>, vector<16x16xf32>
    %c0_3 = arith.constant 0 : index
    %c0_4 = arith.constant 0 : index
    %2 = vector.load %arg3[%c0_3, %c0_4] : memref<16x1xi32, #tpu.memory_space<vmem>>, vector<16x1xi32>
    %c0_5 = arith.constant 0 : index
    %c0_6 = arith.constant 0 : index
    %3 = vector.load %arg4[%c0_5, %c0_6] : memref<16x1xi32, #tpu.memory_space<vmem>>, vector<16x1xi32>
    %4 = tpu.iota {dimensions = array<i32: 1>} : vector<16x16xi32>
    %5 = tpu.iota {dimensions = array<i32: 0>} : vector<16x1xi32>
    %c16_i32 = arith.constant 16 : i32
    %6 = arith.muli %arg0, %c16_i32 : i32
    %7 = vector.broadcast %6 : i32 to vector<16x1xi32>
    %8 = arith.addi %7, %5 : vector<16x1xi32>
    %c24_i32 = arith.constant 24 : i32
    %9 = vector.broadcast %c24_i32 : i32 to vector<16x1xi32>
    %10 = arith.cmpi slt, %8, %9 : vector<16x1xi32>
    %11 = vector.broadcast %2 : vector<16x1xi32> to vector<16x16xi32>
    %12 = arith.cmpi eq, %4, %11 : vector<16x16xi32>
    %cst = arith.constant dense<0xFF800000> : vector<16xf32>
    %13 = vector.multi_reduction <maximumf>, %0, %cst [1] : vector<16x16xf32> to vector<16xf32>
    %14 = vector.shape_cast %13 : vector<16xf32> to vector<16x1xf32>
    %15 = vector.broadcast %14 : vector<16x1xf32> to vector<16x16xf32>
    %16 = arith.subf %0, %15 : vector<16x16xf32>
    %17 = math.exp %16 : vector<16x16xf32>
    %cst_7 = arith.constant dense<0.000000e+00> : vector<16xf32>
    %18 = vector.multi_reduction <add>, %17, %cst_7 [1] : vector<16x16xf32> to vector<16xf32>
    %19 = vector.shape_cast %18 : vector<16xf32> to vector<16x1xf32>
    %20 = math.log %19 : vector<16x1xf32>
    %21 = arith.addf %20, %14 : vector<16x1xf32>
    %22 = vector.broadcast %10 : vector<16x1xi1> to vector<16x16xi1>
    %23 = arith.andi %12, %22 : vector<16x16xi1>
    %cst_8 = arith.constant 0.000000e+00 : f32
    %24 = vector.broadcast %cst_8 : f32 to vector<16x16xf32>
    %25 = arith.select %23, %0, %24 : vector<16x16xi1>, vector<16x16xf32>
    %26 = vector.shape_cast %25 : vector<16x16xf32> to vector<1x16x16xf32>
    %cst_9 = arith.constant dense<0.000000e+00> : vector<1xf32>
    %27 = vector.multi_reduction <add>, %26, %cst_9 [1, 2] : vector<1x16x16xf32> to vector<1xf32>
    %28 = vector.shape_cast %27 : vector<1xf32> to vector<1x1x1xf32>
    %29 = vector.extract %28[0, 0, 0] : f32 from vector<1x1x1xf32>
    %cst_10 = arith.constant 0.000000e+00 : f32
    %30 = vector.broadcast %cst_10 : f32 to vector<16x1xf32>
    %31 = arith.select %10, %21, %30 : vector<16x1xi1>, vector<16x1xf32>
    %32 = vector.shape_cast %31 : vector<16x1xf32> to vector<1x16x1xf32>
    %cst_11 = arith.constant dense<0.000000e+00> : vector<1xf32>
    %33 = vector.multi_reduction <add>, %32, %cst_11 [1, 2] : vector<1x16x1xf32> to vector<1xf32>
    %34 = vector.shape_cast %33 : vector<1xf32> to vector<1x1x1xf32>
    %35 = vector.extract %34[0, 0, 0] : f32 from vector<1x1x1xf32>
    %36 = arith.subf %35, %29 : f32
    %37 = vector.broadcast %14 : vector<16x1xf32> to vector<16x16xf32>
    %38 = arith.cmpf oeq, %0, %37 : vector<16x16xf32>
    %c16_i32_12 = arith.constant 16 : i32
    %39 = vector.broadcast %c16_i32_12 : i32 to vector<16x16xi32>
    %40 = arith.select %38, %4, %39 : vector<16x16xi1>, vector<16x16xi32>
    %cst_13 = arith.constant dense<2147483647> : vector<16xi32>
    %41 = vector.multi_reduction <minsi>, %40, %cst_13 [1] : vector<16x16xi32> to vector<16xi32>
    %42 = vector.shape_cast %41 : vector<16xi32> to vector<16x1xi32>
    %43 = arith.cmpi eq, %42, %2 : vector<16x1xi32>
    %44 = vector.broadcast %3 : vector<16x1xi32> to vector<16x16xi32>
    %45 = arith.cmpi eq, %4, %44 : vector<16x16xi32>
    %cst_14 = arith.constant dense<0xFF800000> : vector<16xf32>
    %46 = vector.multi_reduction <maximumf>, %1, %cst_14 [1] : vector<16x16xf32> to vector<16xf32>
    %47 = vector.shape_cast %46 : vector<16xf32> to vector<16x1xf32>
    %48 = vector.broadcast %47 : vector<16x1xf32> to vector<16x16xf32>
    %49 = arith.subf %1, %48 : vector<16x16xf32>
    %50 = math.exp %49 : vector<16x16xf32>
    %cst_15 = arith.constant dense<0.000000e+00> : vector<16xf32>
    %51 = vector.multi_reduction <add>, %50, %cst_15 [1] : vector<16x16xf32> to vector<16xf32>
    %52 = vector.shape_cast %51 : vector<16xf32> to vector<16x1xf32>
    %53 = math.log %52 : vector<16x1xf32>
    %54 = arith.addf %53, %47 : vector<16x1xf32>
    %55 = vector.broadcast %10 : vector<16x1xi1> to vector<16x16xi1>
    %56 = arith.andi %45, %55 : vector<16x16xi1>
    %cst_16 = arith.constant 0.000000e+00 : f32
    %57 = vector.broadcast %cst_16 : f32 to vector<16x16xf32>
    %58 = arith.select %56, %1, %57 : vector<16x16xi1>, vector<16x16xf32>
    %59 = vector.shape_cast %58 : vector<16x16xf32> to vector<1x16x16xf32>
    %cst_17 = arith.constant dense<0.000000e+00> : vector<1xf32>
    %60 = vector.multi_reduction <add>, %59, %cst_17 [1, 2] : vector<1x16x16xf32> to vector<1xf32>
    %61 = vector.shape_cast %60 : vector<1xf32> to vector<1x1x1xf32>
    %62 = vector.extract %61[0, 0, 0] : f32 from vector<1x1x1xf32>
    %cst_18 = arith.constant 0.000000e+00 : f32
    %63 = vector.broadcast %cst_18 : f32 to vector<16x1xf32>
    %64 = arith.select %10, %54, %63 : vector<16x1xi1>, vector<16x1xf32>
    %65 = vector.shape_cast %64 : vector<16x1xf32> to vector<1x16x1xf32>
    %cst_19 = arith.constant dense<0.000000e+00> : vector<1xf32>
    %66 = vector.multi_reduction <add>, %65, %cst_19 [1, 2] : vector<1x16x1xf32> to vector<1xf32>
    %67 = vector.shape_cast %66 : vector<1xf32> to vector<1x1x1xf32>
    %68 = vector.extract %67[0, 0, 0] : f32 from vector<1x1x1xf32>
    %69 = arith.subf %68, %62 : f32
    %70 = vector.broadcast %47 : vector<16x1xf32> to vector<16x16xf32>
    %71 = arith.cmpf oeq, %1, %70 : vector<16x16xf32>
    %c16_i32_20 = arith.constant 16 : i32
    %72 = vector.broadcast %c16_i32_20 : i32 to vector<16x16xi32>
    %73 = arith.select %71, %4, %72 : vector<16x16xi1>, vector<16x16xi32>
    %cst_21 = arith.constant dense<2147483647> : vector<16xi32>
    %74 = vector.multi_reduction <minsi>, %73, %cst_21 [1] : vector<16x16xi32> to vector<16xi32>
    %75 = vector.shape_cast %74 : vector<16xi32> to vector<16x1xi32>
    %76 = arith.cmpi eq, %75, %3 : vector<16x1xi32>
    %77 = arith.xori %43, %76 : vector<16x1xi1>
    %78 = arith.andi %77, %10 : vector<16x1xi1>
    %cst_22 = arith.constant 1.000000e+00 : f32
    %cst_23 = arith.constant 0.000000e+00 : f32
    %79 = vector.broadcast %cst_22 : f32 to vector<16x1xf32>
    %80 = vector.broadcast %cst_23 : f32 to vector<16x1xf32>
    %81 = arith.select %78, %79, %80 : vector<16x1xi1>, vector<16x1xf32>
    %82 = vector.shape_cast %81 : vector<16x1xf32> to vector<1x16x1xf32>
    %cst_24 = arith.constant dense<0.000000e+00> : vector<1xf32>
    %83 = vector.multi_reduction <add>, %82, %cst_24 [1, 2] : vector<1x16x1xf32> to vector<1xf32>
    %84 = vector.shape_cast %83 : vector<1xf32> to vector<1x1x1xf32>
    %85 = vector.extract %84[0, 0, 0] : f32 from vector<1x1x1xf32>
    %86 = tpu.iota {dimensions = array<i32: 0>} : vector<8x128xi32>
    %87 = tpu.iota {dimensions = array<i32: 1>} : vector<8x128xi32>
    %c0_i32 = arith.constant 0 : i32
    %88 = vector.broadcast %c0_i32 : i32 to vector<8x128xi32>
    %89 = arith.cmpi eq, %86, %88 : vector<8x128xi32>
    %c0_i32_25 = arith.constant 0 : i32
    %90 = vector.broadcast %c0_i32_25 : i32 to vector<8x128xi32>
    %91 = arith.cmpi eq, %87, %90 : vector<8x128xi32>
    %92 = arith.andi %89, %91 : vector<8x128xi1>
    %c0_i32_26 = arith.constant 0 : i32
    %93 = vector.broadcast %c0_i32_26 : i32 to vector<8x128xi32>
    %94 = arith.cmpi eq, %86, %93 : vector<8x128xi32>
    %c1_i32 = arith.constant 1 : i32
    %95 = vector.broadcast %c1_i32 : i32 to vector<8x128xi32>
    %96 = arith.cmpi eq, %87, %95 : vector<8x128xi32>
    %97 = arith.andi %94, %96 : vector<8x128xi1>
    %c0_i32_27 = arith.constant 0 : i32
    %98 = vector.broadcast %c0_i32_27 : i32 to vector<8x128xi32>
    %99 = arith.cmpi eq, %86, %98 : vector<8x128xi32>
    %c2_i32 = arith.constant 2 : i32
    %100 = vector.broadcast %c2_i32 : i32 to vector<8x128xi32>
    %101 = arith.cmpi eq, %87, %100 : vector<8x128xi32>
    %102 = arith.andi %99, %101 : vector<8x128xi1>
    %cst_28 = arith.constant 0.000000e+00 : f32
    %103 = vector.broadcast %85 : f32 to vector<8x128xf32>
    %104 = vector.broadcast %cst_28 : f32 to vector<8x128xf32>
    %105 = arith.select %102, %103, %104 : vector<8x128xi1>, vector<8x128xf32>
    %106 = vector.broadcast %69 : f32 to vector<8x128xf32>
    %107 = arith.select %97, %106, %105 : vector<8x128xi1>, vector<8x128xf32>
    %108 = vector.broadcast %36 : f32 to vector<8x128xf32>
    %109 = arith.select %92, %108, %107 : vector<8x128xi1>, vector<8x128xf32>
    %110 = vector.shape_cast %109 : vector<8x128xf32> to vector<1x8x128xf32>
    %c0_29 = arith.constant 0 : index
    %c0_30 = arith.constant 0 : index
    %c0_31 = arith.constant 0 : index
    %111 = vector.load %arg5[%c0_29, %c0_30, %c0_31] : memref<1x8x128xf32, #tpu.memory_space<vmem>>, vector<1x8x128xf32>
    tpu.vector_store %arg5[%c0_29, %c0_30, %c0_31], %110 {strides = array<i32>} : memref<1x8x128xf32, #tpu.memory_space<vmem>>, vector<1x8x128xf32>,
    return
  }
  func.func @transform_0(%arg0: i32) -> (i32, i32) {
    %c0_i32 = arith.constant 0 : i32
    %c0_i32_0 = arith.constant 0 : i32
    return %arg0, %c0_i32 : i32, i32
  }
  func.func @transform_1(%arg0: i32) -> (i32, i32) {
    %c0_i32 = arith.constant 0 : i32
    %c0_i32_0 = arith.constant 0 : i32
    return %arg0, %c0_i32 : i32, i32
  }
  func.func @transform_2(%arg0: i32) -> (i32, i32) {
    %c0_i32 = arith.constant 0 : i32
    %c0_i32_0 = arith.constant 0 : i32
    return %arg0, %c0_i32 : i32, i32
  }
  func.func @transform_3(%arg0: i32) -> (i32, i32) {
    %c0_i32 = arith.constant 0 : i32
    %c0_i32_0 = arith.constant 0 : i32
    return %arg0, %c0_i32 : i32, i32
  }
  func.func @transform_4(%arg0: i32) -> (i32, i32, i32) {
    %c0_i32 = arith.constant 0 : i32
    %c0_i32_0 = arith.constant 0 : i32
    %c0_i32_1 = arith.constant 0 : i32
    return %arg0, %c0_i32, %c0_i32_0 : i32, i32, i32
  }
}

</mosaic_0001>

<llo_original>
// kernel: tpu_custom_call.1
$region0: #{tpu_custom_call.1}
  #allocation0 [shape = 'u32[]', space=smem, size = 0x4, offset = 0x4, fixed_abs, tag = 'smem constant byte address 0x4 - core index']
  #allocation1 [shape = 'u32[72,128]{1,0:T(1,128)}', space=vmem, size = 0x9000, scoped, tag = 'internal scratch']
  %s0 = inlined_call_operand.vmem [shape: f32[24,16], index: 0, kind: input, shape index: {}]
  %s1 = inlined_call_operand.vmem [shape: f32[24,16], index: 1, kind: input, shape index: {}]
  %s2 = inlined_call_operand.vmem [shape: s32[24,1], index: 2, kind: input, shape index: {}]
  %s3 = inlined_call_operand.vmem [shape: s32[24,1], index: 3, kind: input, shape index: {}]
  %s4 = inlined_call_operand.hbm [shape: f32[2,8,128], index: 4, kind: output, shape index: {}]
  %s5 = sld [smem:[#allocation0]]
  $region49: #{tpu_custom_call.1} parent=0
    _
  %s7 = ssub.s32 1, %s5
  %s8 = scalar_select 0, %s7, %s5
  $region1: #{tpu_custom_call.1} parent=0
    #allocation2 [shape = 'u8[8192]{0}', space=vmem, size = 0x2000, scoped, tag = 'output window, operand 0']
    #allocation3 [shape = 's32[2]{0}', space=sflag, size = 0x8, scoped, tag = 'scoped memory for tpu_custom_call.1']
    %9 = vsyncpa [#allocation3], 0
    %s10 = scalar_lea.sflag [#allocation3], 1
    %11 = vsyncpa %s10, 0
    loop: start=0, step=1, limit=4
    $region2: #{tpu_custom_call.1} parent=1 // loop_pre_header
      _
    $region3: #{tpu_custom_call.1} parent=1 // loop_header
      %s13 = sphi 0, %s17
      %p14 = scmp.ge.s32.totalorder %s13, 4
      %s23 = sphi 0, %s25
      %s26 = sphi 0, %s23
      %s27 = sphi 0, %s26
      %s43 = sphi 0, %s27
      %s49 = sphi 0, %s51
      %s52 = sphi 0, %s49
      %s53 = sphi 0, %s52
      %s69 = sphi 0, %s53
      %s75 = sphi 0, %s77
      %s78 = sphi 0, %s75
      %s79 = sphi 0, %s78
      %s95 = sphi 0, %s79
      %s101 = sphi 0, %s103
      %s104 = sphi 0, %s101
      %s105 = sphi 0, %s104
      %s121 = sphi 0, %s105
      %s127 = sphi 0, %s129
      %s130 = sphi 0, %s127
      %s131 = sphi 0, %s130
      %s147 = sphi 0, %s131
    $region4: #{tpu_custom_call.1} parent=1 // loop_header_branch
      %16 = sbr.rel (%p14) target = $region8
    $region5: #{tpu_custom_call.1} parent=1 // loop_body
      %s18 = ssub.s32 %s13, 1
      %s19 = ssub.s32 %s13, 2
      %s20 = sadd.s32 %s13, 1
      %s21 = ssub.s32 %s13, %s20
      %p22 = scmp.eq.s32.totalorder %s21, 0
      %s24 = sadd.s32 %s23, 1
      %s25 = scalar_select %p22, %s23, %s24
      %p28 = pneg %p22
      %p29 = scmp.eq.s32.totalorder %s13, 1
      %p30 = por %p28, %p29
      %p31 = scmp.ne.s32.totalorder %s23, %s26
      %p32 = scmp.eq.s32.totalorder %s13, 0
      %p33 = por %p31, %p32
      %p34 = scmp.ne.s32.totalorder %s23, %s26
      %p35 = scmp.eq.s32.totalorder %s18, 1
      %p36 = por %p34, %p35
      %p37 = scmp.ne.s32.totalorder %s26, %s27
      %p38 = scmp.eq.s32.totalorder %s18, 0
      %p39 = por %p37, %p38
      %p40 = scmp.ne.s32.totalorder %s26, %s27
      %p41 = scmp.eq.s32.totalorder %s19, 1
      %p42 = por %p40, %p41
      %p44 = scmp.ne.s32.totalorder %s27, %s43
      %p45 = scmp.eq.s32.totalorder %s19, 0
      %p46 = por %p44, %p45
      %s47 = ssub.s32 %s13, %s20
      %p48 = scmp.eq.s32.totalorder %s47, 0
      %s50 = sadd.s32 %s49, 1
      %s51 = scalar_select %p48, %s49, %s50
      %p54 = pneg %p48
      %p55 = scmp.eq.s32.totalorder %s13, 1
      %p56 = por %p54, %p55
      %p57 = scmp.ne.s32.totalorder %s49, %s52
      %p58 = scmp.eq.s32.totalorder %s13, 0
      %p59 = por %p57, %p58
      %p60 = scmp.ne.s32.totalorder %s49, %s52
      %p61 = scmp.eq.s32.totalorder %s18, 1
      %p62 = por %p60, %p61
      %p63 = scmp.ne.s32.totalorder %s52, %s53
      %p64 = scmp.eq.s32.totalorder %s18, 0
      %p65 = por %p63, %p64
      %p66 = scmp.ne.s32.totalorder %s52, %s53
      %p67 = scmp.eq.s32.totalorder %s19, 1
      %p68 = por %p66, %p67
      %p70 = scmp.ne.s32.totalorder %s53, %s69
      %p71 = scmp.eq.s32.totalorder %s19, 0
      %p72 = por %p70, %p71
      %s73 = ssub.s32 %s13, %s20
      %p74 = scmp.eq.s32.totalorder %s73, 0
      %s76 = sadd.s32 %s75, 1
      %s77 = scalar_select %p74, %s75, %s76
      %p80 = pneg %p74
      %p81 = scmp.eq.s32.totalorder %s13, 1
      %p82 = por %p80, %p81
      %p83 = scmp.ne.s32.totalorder %s75, %s78
      %p84 = scmp.eq.s32.totalorder %s13, 0
      %p85 = por %p83, %p84
      %p86 = scmp.ne.s32.totalorder %s75, %s78
      %p87 = scmp.eq.s32.totalorder %s18, 1
      %p88 = por %p86, %p87
      %p89 = scmp.ne.s32.totalorder %s78, %s79
      %p90 = scmp.eq.s32.totalorder %s18, 0
      %p91 = por %p89, %p90
      %p92 = scmp.ne.s32.totalorder %s78, %s79
      %p93 = scmp.eq.s32.totalorder %s19, 1
      %p94 = por %p92, %p93
      %p96 = scmp.ne.s32.totalorder %s79, %s95
      %p97 = scmp.eq.s32.totalorder %s19, 0
      %p98 = por %p96, %p97
      %s99 = ssub.s32 %s13, %s20
      %p100 = scmp.eq.s32.totalorder %s99, 0
      %s102 = sadd.s32 %s101, 1
      %s103 = scalar_select %p100, %s101, %s102
      %p106 = pneg %p100
      %p107 = scmp.eq.s32.totalorder %s13, 1
      %p108 = por %p106, %p107
      %p109 = scmp.ne.s32.totalorder %s101, %s104
      %p110 = scmp.eq.s32.totalorder %s13, 0
      %p111 = por %p109, %p110
      %p112 = scmp.ne.s32.totalorder %s101, %s104
      %p113 = scmp.eq.s32.totalorder %s18, 1
      %p114 = por %p112, %p113
      %p115 = scmp.ne.s32.totalorder %s104, %s105
      %p116 = scmp.eq.s32.totalorder %s18, 0
      %p117 = por %p115, %p116
      %p118 = scmp.ne.s32.totalorder %s104, %s105
      %p119 = scmp.eq.s32.totalorder %s19, 1
      %p120 = por %p118, %p119
      %p122 = scmp.ne.s32.totalorder %s105, %s121
      %p123 = scmp.eq.s32.totalorder %s19, 0
      %p124 = por %p122, %p123
      %s125 = ssub.s32 %s13, %s20
      %p126 = scmp.eq.s32.totalorder %s125, 0
      %s128 = sadd.s32 %s127, 1
      %s129 = scalar_select %p126, %s127, %s128
      %p132 = pneg %p126
      %p133 = scmp.eq.s32.totalorder %s13, 1
      %p134 = por %p132, %p133
      %p135 = scmp.ne.s32.totalorder %s127, %s130
      %p136 = scmp.eq.s32.totalorder %s13, 0
      %p137 = por %p135, %p136
      %p138 = scmp.ne.s32.totalorder %s127, %s130
      %p139 = scmp.eq.s32.totalorder %s18, 1
      %p140 = por %p138, %p139
      %p141 = scmp.ne.s32.totalorder %s130, %s131
      %p142 = scmp.eq.s32.totalorder %s18, 0
      %p143 = por %p141, %p142
      %p144 = scmp.ne.s32.totalorder %s130, %s131
      %p145 = scmp.eq.s32.totalorder %s19, 1
      %p146 = por %p144, %p145
      %p148 = scmp.ne.s32.totalorder %s131, %s147
      %p149 = scmp.eq.s32.totalorder %s19, 0
      %p150 = por %p148, %p149
      %p151 = scmp.le.s32.totalorder 1, %s13
      %p152 = scmp.lt.s32.totalorder %s13, 3
      %p153 = pnand %p151, %p152
      %p154 = pneg %p153
      // Predicated region
      $region9: #{tpu_custom_call.1} parent=5 // pred_check
        _
      $region10: #{tpu_custom_call.1} parent=5 // pred_check_branch
        %156 = sbr.rel (%p153) target = $region12
      $region11: #{tpu_custom_call.1} parent=5 // pred_region
        %s157 = ssub.s32 %s13, 1
      $region12: #{tpu_custom_call.1} parent=5 // pred_fallthru
        _
      %p158 = scmp.lt.s32.totalorder %s13, 2
      // Predicated region
      $region13: #{tpu_custom_call.1} parent=5 // pred_check
        %p159 = pneg %p158
      $region14: #{tpu_custom_call.1} parent=5 // pred_check_branch
        %161 = sbr.rel (%p159) target = $region16
      $region15: #{tpu_custom_call.1} parent=5 // pred_region
        // Predicated region
        $region17: #{tpu_custom_call.1} parent=15 // pred_check
          %p162 = pneg %p33
        $region18: #{tpu_custom_call.1} parent=15 // pred_check_branch
          %164 = sbr.rel (%p162) target = $region20
        $region19: #{tpu_custom_call.1} parent=15 // pred_region
          %s165 = smul.u32 2, %s13
          %s166 = ssub.s32 3, %s165
          %p167 = scmp.lt.s32.totalorder %s166, 2
          %s168 = scalar_select %p167, %s166, 2
          %s169 = smul.u32 8, %s168
          %p170 = scmp.lt.s32.totalorder %s165, 2
          %s171 = scalar_select %p170, %s165, 2
          %s172 = smul.addr %s171, 8
          %s173 = scalar_lea.vmem %s0, %s172
          %s174 = smul.u32 2, %s13
          %s175 = ssub.s32 3, %s174
          %p176 = scmp.lt.s32.totalorder %s175, 2
          %s177 = scalar_select %p176, %s175, 2
          %s178 = smul.u32 8, %s177
        $region20: #{tpu_custom_call.1} parent=15 // pred_fallthru
          _
        // Predicated region
        $region21: #{tpu_custom_call.1} parent=15 // pred_check
          %p179 = pneg %p59
        $region22: #{tpu_custom_call.1} parent=15 // pred_check_branch
          %181 = sbr.rel (%p179) target = $region24
        $region23: #{tpu_custom_call.1} parent=15 // pred_region
          %s182 = smul.u32 2, %s13
          %s183 = ssub.s32 3, %s182
          %p184 = scmp.lt.s32.totalorder %s183, 2
          %s185 = scalar_select %p184, %s183, 2
          %s186 = smul.u32 8, %s185
          %p187 = scmp.lt.s32.totalorder %s182, 2
          %s188 = scalar_select %p187, %s182, 2
          %s189 = smul.addr %s188, 8
          %s190 = scalar_lea.vmem %s1, %s189
          %s191 = smul.u32 2, %s13
          %s192 = ssub.s32 3, %s191
          %p193 = scmp.lt.s32.totalorder %s192, 2
          %s194 = scalar_select %p193, %s192, 2
          %s195 = smul.u32 8, %s194
        $region24: #{tpu_custom_call.1} parent=15 // pred_fallthru
          _
        // Predicated region
        $region25: #{tpu_custom_call.1} parent=15 // pred_check
          %p196 = pneg %p85
        $region26: #{tpu_custom_call.1} parent=15 // pred_check_branch
          %198 = sbr.rel (%p196) target = $region28
        $region27: #{tpu_custom_call.1} parent=15 // pred_region
          %s199 = smul.u32 2, %s13
          %s200 = ssub.s32 3, %s199
          %p201 = scmp.lt.s32.totalorder %s200, 2
          %s202 = scalar_select %p201, %s200, 2
          %s203 = smul.u32 8, %s202
          %p204 = scmp.lt.s32.totalorder %s199, 2
          %s205 = scalar_select %p204, %s199, 2
          %s206 = smul.addr %s205, 8
          %s207 = scalar_lea.vmem %s2, %s206
          %s208 = smul.u32 2, %s13
          %s209 = ssub.s32 3, %s208
          %p210 = scmp.lt.s32.totalorder %s209, 2
          %s211 = scalar_select %p210, %s209, 2
          %s212 = smul.u32 8, %s211
        $region28: #{tpu_custom_call.1} parent=15 // pred_fallthru
          _
        // Predicated region
        $region29: #{tpu_custom_call.1} parent=15 // pred_check
          %p213 = pneg %p111
        $region30: #{tpu_custom_call.1} parent=15 // pred_check_branch
          %215 = sbr.rel (%p213) target = $region32
        $region31: #{tpu_custom_call.1} parent=15 // pred_region
          %s216 = smul.u32 2, %s13
          %s217 = ssub.s32 3, %s216
          %p218 = scmp.lt.s32.totalorder %s217, 2
          %s219 = scalar_select %p218, %s217, 2
          %s220 = smul.u32 8, %s219
          %p221 = scmp.lt.s32.totalorder %s216, 2
          %s222 = scalar_select %p221, %s216, 2
          %s223 = smul.addr %s222, 8
          %s224 = scalar_lea.vmem %s3, %s223
          %s225 = smul.u32 2, %s13
          %s226 = ssub.s32 3, %s225
          %p227 = scmp.lt.s32.totalorder %s226, 2
          %s228 = scalar_select %p227, %s226, 2
          %s229 = smul.u32 8, %s228
        $region32: #{tpu_custom_call.1} parent=15 // pred_fallthru
          _
      $region16: #{tpu_custom_call.1} parent=5 // pred_fallthru
        _
      %p230 = scmp.le.s32.totalorder 1, %s13
      %p231 = scmp.lt.s32.totalorder %s13, 3
      %p232 = pnand %p230, %p231
      %p233 = pneg %p232
      // Predicated region
      $region33: #{tpu_custom_call.1} parent=5 // pred_check
        _
      $region34: #{tpu_custom_call.1} parent=5 // pred_check_branch
        %235 = sbr.rel (%p232) target = $region36
      $region35: #{tpu_custom_call.1} parent=5 // pred_region
        %s236 = ssub.s32 %s13, 1
        %s237 = smul.u32 2, %s18
        %s238 = ssub.s32 3, %s237
        %p239 = scmp.lt.s32.totalorder %s238, 2
        %s240 = scalar_select %p239, %s238, 2
        %s241 = smul.u32 8, %s240
        %p242 = scmp.lt.s32.totalorder %s237, 2
        %s243 = scalar_select %p242, %s237, 2
        %s244 = smul.addr %s243, 8
        %s245 = scalar_lea.vmem %s0, %s244
        %p246 = pneg %p39
        %p247 = pneg %p36
        %s248 = smul.u32 2, %s18
        %s249 = ssub.s32 3, %s248
        %p250 = scmp.lt.s32.totalorder %s249, 2
        %s251 = scalar_select %p250, %s249, 2
        %s252 = smul.u32 8, %s251
        %p253 = scmp.lt.s32.totalorder %s248, 2
        %s254 = scalar_select %p253, %s248, 2
        %s255 = smul.addr %s254, 8
        %s256 = scalar_lea.vmem %s1, %s255
        %p257 = pneg %p65
        %p258 = pneg %p62
        %s259 = smul.u32 2, %s18
        %s260 = ssub.s32 3, %s259
        %p261 = scmp.lt.s32.totalorder %s260, 2
        %s262 = scalar_select %p261, %s260, 2
        %s263 = smul.u32 8, %s262
        %p264 = scmp.lt.s32.totalorder %s259, 2
        %s265 = scalar_select %p264, %s259, 2
        %s266 = smul.addr %s265, 8
        %s267 = scalar_lea.vmem %s2, %s266
        %p268 = pneg %p91
        %p269 = pneg %p88
        %s270 = smul.u32 2, %s18
        %s271 = ssub.s32 3, %s270
        %p272 = scmp.lt.s32.totalorder %s271, 2
        %s273 = scalar_select %p272, %s271, 2
        %s274 = smul.u32 8, %s273
        %p275 = scmp.lt.s32.totalorder %s270, 2
        %s276 = scalar_select %p275, %s270, 2
        %s277 = smul.addr %s276, 8
        %s278 = scalar_lea.vmem %s3, %s277
        %p279 = pneg %p117
        %p280 = pneg %p114
        %p281 = pneg %p143
        %p282 = pneg %p140
        %s283 = sand.u32 %s130, 1
        %s284 = scalar_lea.sflag [#allocation3], %s283
        %s285 = sand.u32 %s130, 1
        %s286 = smul.addr %s285, 8
        %s287 = scalar_lea.vmem [#allocation2], %s286
        %s288 = smul.u32 2, %s18
        %s289 = ssub.s32 3, %s288
        %p290 = scmp.lt.s32.totalorder %s289, 2
        %s291 = scalar_select %p290, %s289, 2
        %s292 = smul.u32 8, %s291
        %p293 = scmp.lt.s32.totalorder %s288, 2
        %s294 = scalar_select %p293, %s288, 2
        %s295 = smul.addr %s294, 8
        %s296 = scalar_lea.vmem %s0, %s295
        %s297 = smul.u32 2, %s18
        %s298 = ssub.s32 3, %s297
        %p299 = scmp.lt.s32.totalorder %s298, 2
        %s300 = scalar_select %p299, %s298, 2
        %s301 = smul.u32 8, %s300
        %s302 = smul.u32 2, %s18
        %s303 = ssub.s32 3, %s302
        %p304 = scmp.lt.s32.totalorder %s303, 2
        %s305 = scalar_select %p304, %s303, 2
        %s306 = smul.u32 8, %s305
        %p307 = scmp.lt.s32.totalorder %s302, 2
        %s308 = scalar_select %p307, %s302, 2
        %s309 = smul.addr %s308, 8
        %s310 = scalar_lea.vmem %s1, %s309
        %s311 = smul.u32 2, %s18
        %s312 = ssub.s32 3, %s311
        %p313 = scmp.lt.s32.totalorder %s312, 2
        %s314 = scalar_select %p313, %s312, 2
        %s315 = smul.u32 8, %s314
        %s316 = smul.u32 2, %s18
        %s317 = ssub.s32 3, %s316
        %p318 = scmp.lt.s32.totalorder %s317, 2
        %s319 = scalar_select %p318, %s317, 2
        %s320 = smul.u32 8, %s319
        %p321 = scmp.lt.s32.totalorder %s316, 2
        %s322 = scalar_select %p321, %s316, 2
        %s323 = smul.addr %s322, 8
        %s324 = scalar_lea.vmem %s2, %s323
        %s325 = smul.u32 2, %s18
        %s326 = ssub.s32 3, %s325
        %p327 = scmp.lt.s32.totalorder %s326, 2
        %s328 = scalar_select %p327, %s326, 2
        %s329 = smul.u32 8, %s328
        %s330 = smul.u32 2, %s18
        %s331 = ssub.s32 3, %s330
        %p332 = scmp.lt.s32.totalorder %s331, 2
        %s333 = scalar_select %p332, %s331, 2
        %s334 = smul.u32 8, %s333
        %p335 = scmp.lt.s32.totalorder %s330, 2
        %s336 = scalar_select %p335, %s330, 2
        %s337 = smul.addr %s336, 8
        %s338 = scalar_lea.vmem %s3, %s337
        %s339 = smul.u32 2, %s18
        %s340 = ssub.s32 3, %s339
        %p341 = scmp.lt.s32.totalorder %s340, 2
        %s342 = scalar_select %p341, %s340, 2
        %s343 = smul.u32 8, %s342
        %v344 = vld [vmem:[%s296] sm:$0xff]
        %v345 = vld [vmem:[%s296 + $0x8] sm:$0xff]
        %v346 = vld [vmem:[%s310] sm:$0xff]
        %v347 = vld [vmem:[%s310 + $0x8] sm:$0xff]
        %v348 = vld [vmem:[%s324] sm:$0xff]
        %v349 = vld [vmem:[%s324 + $0x8] sm:$0xff]
        %v350 = vld [vmem:[%s338] sm:$0xff]
        %v351 = vld [vmem:[%s338 + $0x8] sm:$0xff]
        %v352 = vlaneseq
        %v353 = vand.u32 %v352, 127
        %v354 = vlaneseq
        %v355 = vshrl.u32 %v354, 7
        %v356 = vadd.s32 %v355, 8
        %s357 = smul.u32 %s18, 16
        %v358 = vstv %s357
        %v359 = vadd.s32 %v358, %v355
        %v360 = vadd.s32 %v358, %v356
        %vm361 = vcmp.lt.s32.totalorder %v359, 24
        %vm362 = vcmp.lt.s32.totalorder %v360, 24
        %363 = vset.pattern.permute.xlu0 0
        %364 = vperm.xlu0 %363, %v348
        %v365 = vpop.permute.xlu0 %364
        %366 = vset.pattern.permute.xlu0 0
        %367 = vperm.xlu0 %366, %v349
        %v368 = vpop.permute.xlu0 %367
        %vm369 = vcmp.eq.s32.totalorder %v353, %v365
        %vm370 = vcmp.eq.s32.totalorder %v353, %v368
        %vm371 = vcmask 130048
        %v372 = vsel %vm371, %v344, -inf
        %373 = vmax.xlane.f32.xlu0 %v372
        %v374 = vpop.xlane.xlu0 %373
        %v375 = vsel %vm371, %v345, -inf
        %376 = vmax.xlane.f32.xlu0 %v375
        %v377 = vpop.xlane.xlu0 %376
        %v378 = vsub.f32 %v344, %v374
        %v379 = vsub.f32 %v345, %v377
        %v380 = vmul.f32 %v378, 1.442695
        %v381 = vpow.pop %v380
        %v382 = vmul.f32 %v379, 1.442695
        %v383 = vpow.pop %v382
        %v384 = vsel %vm371, %v381, 0.0
        %385 = vadd.xlane.f32.xlu0 %v384
        %v386 = vpop.xlane.xlu0 %385
        %v387 = vsel %vm371, %v383, 0.0
        %388 = vadd.xlane.f32.xlu0 %v387
        %v389 = vpop.xlane.xlu0 %388
        %v390 = vlog2.pop %v386
        %v391 = vmul.f32 %v390, 0.6931472
        %v392 = vlog2.pop %v389
        %v393 = vmul.f32 %v392, 0.6931472
        %v394 = vadd.f32 %v391, %v374
        %v395 = vadd.f32 %v393, %v377
        %v396 = vsel %vm361, 1, 0
        %v397 = vsel %vm362, 1, 0
        %vm398 = vcmp.eq.s32.totalorder %v396, 1
        %vm399 = vcmp.eq.s32.totalorder %v397, 1
        %vm400 = vmand %vm369, %vm398
        %vm401 = vmand %vm370, %vm399
        %v402 = vsel %vm400, %v344, 0.0
        %v403 = vsel %vm401, %v345, 0.0
        %v404 = vsel %vm371, %v402, 0.0
        %v405 = vsel %vm371, %v403, 0.0
        %v406 = vadd.f32 %v404, %v405
        %407 = vadd.xlane.f32.xlu0 %v406
        %v408 = vpop.xlane.xlu0 %407
        %v409 = vrot.slane %v408, 4
        %v410 = vadd.f32 %v408, %v409
        %v411 = vrot.slane %v410, 2
        %v412 = vadd.f32 %v410, %v411
        %v413 = vrot.slane %v412, 1
        %v414 = vadd.f32 %v412, %v413
        %s415 = vtos %v414
        %v416 = vsel %vm361, %v394, 0.0
        %v417 = vsel %vm362, %v395, 0.0
        %vm418 = vcmask 7168
        %v419 = vsel %vm418, %v416, 0.0
        %v420 = vsel %vm418, %v417, 0.0
        %v421 = vadd.f32 %v419, %v420
        %422 = vadd.xlane.f32.xlu0 %v421
        %v423 = vpop.xlane.xlu0 %422
        %v424 = vrot.slane %v423, 4
        %v425 = vadd.f32 %v423, %v424
        %v426 = vrot.slane %v425, 2
        %v427 = vadd.f32 %v425, %v426
        %v428 = vrot.slane %v427, 1
        %v429 = vadd.f32 %v427, %v428
        %s430 = vtos %v429
        %s431 = ssub.f32 %s430, %s415
        %vm432 = vcmp.eq.f32.partialorder %v344, %v374
        %vm433 = vcmp.eq.f32.partialorder %v345, %v377
        %v434 = vsel %vm432, %v353, 16
        %v435 = vsel %vm433, %v353, 16
        %v436 = vsel %vm371, %v434, 2147483647
        %v437 = vand.u32 %v436, 65535
        %v438 = vshra.s32 %v436, 16
        %v439 = vcvt.s32.f32 %v437
        %v440 = vcvt.s32.f32 %v438
        %441 = vmin.xlane.f32.xlu0 %v440
        %v442 = vpop.xlane.xlu0 %441
        %vm443 = vcmp.eq.f32.partialorder %v440, %v442
        %v444 = vsel %vm443, %v439, inf
        %445 = vmin.xlane.f32.xlu0 %v444
        %v446 = vpop.xlane.xlu0 %445
        %v447 = vcvt.f32.s32 %v446
        %v448 = vcvt.f32.s32 %v442
        %v449 = vshll.u32 %v448, 16
        %v450 = vadd.s32 %v449, %v447
        %v451 = vsel %vm371, %v435, 2147483647
        %v452 = vand.u32 %v451, 65535
        %v453 = vshra.s32 %v451, 16
        %v454 = vcvt.s32.f32 %v452
        %v455 = vcvt.s32.f32 %v453
        %456 = vmin.xlane.f32.xlu0 %v455
        %v457 = vpop.xlane.xlu0 %456
        %vm458 = vcmp.eq.f32.partialorder %v455, %v457
        %v459 = vsel %vm458, %v454, inf
        %460 = vmin.xlane.f32.xlu0 %v459
        %v461 = vpop.xlane.xlu0 %460
        %v462 = vcvt.f32.s32 %v461
        %v463 = vcvt.f32.s32 %v457
        %v464 = vshll.u32 %v463, 16
        %v465 = vadd.s32 %v464, %v462
        %vm466 = vcmp.eq.s32.totalorder %v450, %v348
        %vm467 = vcmp.eq.s32.totalorder %v465, %v349
        %468 = vset.pattern.permute.xlu0 0
        %469 = vperm.xlu0 %468, %v350
        %v470 = vpop.permute.xlu0 %469
        %471 = vset.pattern.permute.xlu0 0
        %472 = vperm.xlu0 %471, %v351
        %v473 = vpop.permute.xlu0 %472
        %vm474 = vcmp.eq.s32.totalorder %v353, %v470
        %vm475 = vcmp.eq.s32.totalorder %v353, %v473
        %v476 = vsel %vm371, %v346, -inf
        %477 = vmax.xlane.f32.xlu0 %v476
        %v478 = vpop.xlane.xlu0 %477
        %v479 = vsel %vm371, %v347, -inf
        %480 = vmax.xlane.f32.xlu0 %v479
        %v481 = vpop.xlane.xlu0 %480
        %v482 = vsub.f32 %v346, %v478
        %v483 = vsub.f32 %v347, %v481
        %v484 = vmul.f32 %v482, 1.442695
        %v485 = vpow.pop %v484
        %v486 = vmul.f32 %v483, 1.442695
        %v487 = vpow.pop %v486
        %v488 = vsel %vm371, %v485, 0.0
        %489 = vadd.xlane.f32.xlu0 %v488
        %v490 = vpop.xlane.xlu0 %489
        %v491 = vsel %vm371, %v487, 0.0
        %492 = vadd.xlane.f32.xlu0 %v491
        %v493 = vpop.xlane.xlu0 %492
        %v494 = vlog2.pop %v490
        %v495 = vmul.f32 %v494, 0.6931472
        %v496 = vlog2.pop %v493
        %v497 = vmul.f32 %v496, 0.6931472
        %v498 = vadd.f32 %v495, %v478
        %v499 = vadd.f32 %v497, %v481
        %vm500 = vmand %vm474, %vm398
        %vm501 = vmand %vm475, %vm399
        %v502 = vsel %vm500, %v346, 0.0
        %v503 = vsel %vm501, %v347, 0.0
        %v504 = vsel %vm371, %v502, 0.0
        %v505 = vsel %vm371, %v503, 0.0
        %v506 = vadd.f32 %v504, %v505
        %507 = vadd.xlane.f32.xlu0 %v506
        %v508 = vpop.xlane.xlu0 %507
        %v509 = vrot.slane %v508, 4
        %v510 = vadd.f32 %v508, %v509
        %v511 = vrot.slane %v510, 2
        %v512 = vadd.f32 %v510, %v511
        %v513 = vrot.slane %v512, 1
        %v514 = vadd.f32 %v512, %v513
        %s515 = vtos %v514
        %v516 = vsel %vm361, %v498, 0.0
        %v517 = vsel %vm362, %v499, 0.0
        %v518 = vsel %vm418, %v516, 0.0
        %v519 = vsel %vm418, %v517, 0.0
        %v520 = vadd.f32 %v518, %v519
        %521 = vadd.xlane.f32.xlu0 %v520
        %v522 = vpop.xlane.xlu0 %521
        %v523 = vrot.slane %v522, 4
        %v524 = vadd.f32 %v522, %v523
        %v525 = vrot.slane %v524, 2
        %v526 = vadd.f32 %v524, %v525
        %v527 = vrot.slane %v526, 1
        %v528 = vadd.f32 %v526, %v527
        %s529 = vtos %v528
        %s530 = ssub.f32 %s529, %s515
        %vm531 = vcmp.eq.f32.partialorder %v346, %v478
        %vm532 = vcmp.eq.f32.partialorder %v347, %v481
        %v533 = vsel %vm531, %v353, 16
        %v534 = vsel %vm532, %v353, 16
        %v535 = vsel %vm371, %v533, 2147483647
        %v536 = vand.u32 %v535, 65535
        %v537 = vshra.s32 %v535, 16
        %v538 = vcvt.s32.f32 %v536
        %v539 = vcvt.s32.f32 %v537
        %540 = vmin.xlane.f32.xlu0 %v539
        %v541 = vpop.xlane.xlu0 %540
        %vm542 = vcmp.eq.f32.partialorder %v539, %v541
        %v543 = vsel %vm542, %v538, inf
        %544 = vmin.xlane.f32.xlu0 %v543
        %v545 = vpop.xlane.xlu0 %544
        %v546 = vcvt.f32.s32 %v545
        %v547 = vcvt.f32.s32 %v541
        %v548 = vshll.u32 %v547, 16
        %v549 = vadd.s32 %v548, %v546
        %v550 = vsel %vm371, %v534, 2147483647
        %v551 = vand.u32 %v550, 65535
        %v552 = vshra.s32 %v550, 16
        %v553 = vcvt.s32.f32 %v551
        %v554 = vcvt.s32.f32 %v552
        %555 = vmin.xlane.f32.xlu0 %v554
        %v556 = vpop.xlane.xlu0 %555
        %vm557 = vcmp.eq.f32.partialorder %v554, %v556
        %v558 = vsel %vm557, %v553, inf
        %559 = vmin.xlane.f32.xlu0 %v558
        %v560 = vpop.xlane.xlu0 %559
        %v561 = vcvt.f32.s32 %v560
        %v562 = vcvt.f32.s32 %v556
        %v563 = vshll.u32 %v562, 16
        %v564 = vadd.s32 %v563, %v561
        %vm565 = vcmp.eq.s32.totalorder %v549, %v350
        %vm566 = vcmp.eq.s32.totalorder %v564, %v351
        %vm567 = vmxor %vm466, %vm565
        %vm568 = vmxor %vm467, %vm566
        %vm569 = vmand %vm567, %vm361
        %vm570 = vmand %vm568, %vm362
        %v571 = vsel %vm569, 1.0, 0.0
        %v572 = vsel %vm570, 1.0, 0.0
        %v573 = vsel %vm418, %v571, 0.0
        %v574 = vsel %vm418, %v572, 0.0
        %v575 = vadd.f32 %v573, %v574
        %576 = vadd.xlane.f32.xlu0 %v575
        %v577 = vpop.xlane.xlu0 %576
        %v578 = vrot.slane %v577, 4
        %v579 = vadd.f32 %v577, %v578
        %v580 = vrot.slane %v579, 2
        %v581 = vadd.f32 %v579, %v580
        %v582 = vrot.slane %v581, 1
        %v583 = vadd.f32 %v581, %v582
        %s584 = vtos %v583
        %vm585 = vcmp.eq.s32.totalorder %v355, 0
        %vm586 = vcmp.eq.s32.totalorder %v353, 0
        %vm587 = vmand %vm585, %vm586
        %vm588 = vcmp.eq.s32.totalorder %v353, 1
        %vm589 = vmand %vm585, %vm588
        %vm590 = vcmp.eq.s32.totalorder %v353, 2
        %vm591 = vmand %vm585, %vm590
        %v592 = vstv %s584
        %v593 = vsel %vm591, %v592, 0.0
        %v594 = vstv %s530
        %v595 = vsel %vm589, %v594, %v593
        %v596 = vstv %s431
        %v597 = vsel %vm587, %v596, %v595
        %598 = vst [vmem:[%s287] sm:$0xff] %v597
        %s599 = sand.u32 %s130, 1
        %s600 = scalar_lea.sflag [#allocation3], %s599
        %s601 = sand.u32 %s130, 1
        %s602 = smul.addr %s601, 8
        %s603 = scalar_lea.vmem [#allocation2], %s602
        // Predicated region
        $region37: #{tpu_custom_call.1} parent=35 // pred_check
          %p604 = pneg %p140
        $region38: #{tpu_custom_call.1} parent=35 // pred_check_branch
          %606 = sbr.rel (%p604) target = $region40
        $region39: #{tpu_custom_call.1} parent=35 // pred_region
          %608 = vsyncadd %s600, 0
          %s609 = smul.addr %s18, 8
          %s610 = scalar_lea.hbm %s4, %s609
          %s612 = sshll.u32 %s603, 4
          %s613 = int_to_ptr.vmem [resolvable:$true] %s612
          %s614 = sshll.u32 %s610, 4
          %s615 = int_to_ptr.hbm [resolvable:$true] %s614
          %617 = dma.vmem_to_hbm [thread:$0]  %s613, 128, %s615, %s600
        $region40: #{tpu_custom_call.1} parent=35 // pred_fallthru
          _
      $region36: #{tpu_custom_call.1} parent=5 // pred_fallthru
        _
      %p618 = scmp.le.s32.totalorder 2, %s13
      // Predicated region
      $region41: #{tpu_custom_call.1} parent=5 // pred_check
        %p619 = pneg %p618
      $region42: #{tpu_custom_call.1} parent=5 // pred_check_branch
        %621 = sbr.rel (%p619) target = $region44
      $region43: #{tpu_custom_call.1} parent=5 // pred_region
        %s622 = ssub.s32 %s13, 2
        // Predicated region
        $region45: #{tpu_custom_call.1} parent=43 // pred_check
          %p623 = pneg %p146
        $region46: #{tpu_custom_call.1} parent=43 // pred_check_branch
          %625 = sbr.rel (%p623) target = $region48
        $region47: #{tpu_custom_call.1} parent=43 // pred_region
          %s626 = sand.u32 %s131, 1
          %s627 = scalar_lea.sflag [#allocation3], %s626
          %s628 = sand.u32 %s131, 1
          %s629 = smul.addr %s628, 8
          %s630 = scalar_lea.vmem [#allocation2], %s629
          %632 = dma.done %s627, 128
        $region48: #{tpu_custom_call.1} parent=43 // pred_fallthru
          _
      $region44: #{tpu_custom_call.1} parent=5 // pred_fallthru
        _
    $region6: #{tpu_custom_call.1} parent=1 // loop_footer
      %s17 = sadd.s32 1, %s13
    $region7: #{tpu_custom_call.1} parent=1 // loop_footer_branch
      %12 = sbr.rel target = $region3
    $region8: #{tpu_custom_call.1} parent=1 // loop_exit
      _
    %633 = vsyncpa [#allocation3], 1
    %s634 = scalar_lea.sflag [#allocation3], 1
    %635 = vsyncpa %s634, 1

</llo_original>
